<compile_context>
chip_gen: v5e
topology: v5e:2x2
jax: 0.10.0
libtpu: 0.0.40
codegen_flags: <defaults>
</compile_context>

<pallas_src>
import functools

import jax
import jax.numpy as jnp
from jax.experimental import pallas as pl
from jax.experimental.pallas import tpu as pltpu


# ----------------------------------------------------------------------------
# Kernel
# ----------------------------------------------------------------------------
def ddpm_kernel(
    xin_ref,                       # [TB, n_small + 1] f32 : [x | onehot(y) | t]
    wt1_ref, bt1_ref,              # time_embed layer 1 (K=1), f32, VPU
    wt2w1t_ref,                    # [32, 128]  folded time weight (MXU dtype)
    wxl_ref,                       # [n_small, 128] f32, consumed by VPU FMAs
    b1_ref,                        # [1, 128] f32 (includes bt2 @ W1t)
    w2_ref, b2_ref,                # [128, 512] / [1, 512]
    w3_ref, b3_ref,                # [512, n_dim] / [1, n_dim]
    out_ref,                       # [TB, n_dim] f32
):
    f32 = jnp.float32
    mx = w2_ref.dtype              # MXU input dtype (bf16 default; f32 path too)
    n_small = wxl_ref.shape[0]     # n_dim + n_emb; the t column follows it

    xin = xin_ref[...]                                    # [TB, n_small + 1]
    t = xin[:, n_small:n_small + 1]                       # [TB, 1]

    # time_embed layer 1: Linear(1, 32) + ReLU as a VPU rank-1 broadcast FMA
    # (a K=1 MXU push would waste a full zero-padded push).
    h_t = jnp.maximum(t * wt1_ref[...] + bt1_ref[...], 0.0)   # [TB, 32] f32

    # h1 = relu( time_emb @ (wt2@W1t)  +  [x | onehot] @ [W1x ; emb@W1l]  + b1' )
    #  - the K=32 time contribution uses the MXU,
    #  - the tiny-K (n_dim + n_emb <= ~8) contribution is unrolled VPU FMAs.
    h1 = (
        jnp.dot(h_t.astype(mx), wt2w1t_ref[...], preferred_element_type=f32)
        + b1_ref[...]
    )
    for k in range(n_small):                               # static unroll
        h1 = h1 + xin[:, k:k + 1] * wxl_ref[k:k + 1, :]    # [TB,1]*[1,128]
    h1 = jnp.maximum(h1, 0.0)

    h2 = jnp.maximum(
        jnp.dot(h1.astype(mx), w2_ref[...], preferred_element_type=f32)
        + b2_ref[...],
        0.0,
    )

    out_ref[...] = (
        jnp.dot(h2.astype(mx), w3_ref[...], preferred_element_type=f32)
        + b3_ref[...]
    ).astype(out_ref.dtype)


# ----------------------------------------------------------------------------
# Parameters
# ----------------------------------------------------------------------------
def init_params(key, n_classes=2, n_dim=3):
    """Deterministic synthetic params. Linear weights stored [in, out]
    (transpose of torch's nn.Linear weight layout)."""
    ks = jax.random.split(key, 11)

    def lin(kw, kb, fan_in, fan_out):
        bound = 1.0 / jnp.sqrt(fan_in)
        w = jax.random.uniform(kw, (fan_in, fan_out), jnp.float32, -bound, bound)
        b = jax.random.uniform(kb, (1, fan_out), jnp.float32, -bound, bound)
        return w, b

    wt1, bt1 = lin(ks[0], ks[1], 1, 32)
    wt2, bt2 = lin(ks[2], ks[3], 32, 32)
    emb = jax.random.normal(ks[4], (n_classes + 1, 32), jnp.float32)
    w1, b1 = lin(ks[5], ks[6], n_dim + 64, 128)
    w2, b2 = lin(ks[7], ks[8], 128, 512)
    w3, b3 = lin(ks[9], ks[10], 512, n_dim)

    return dict(
        wt1=wt1, bt1=bt1, wt2=wt2, bt2=bt2, emb=emb,
        # W1 split along its input dim: [0:n_dim]=x, [n_dim:n_dim+32]=time, rest=label.
        w1x=w1[:n_dim], w1t=w1[n_dim:n_dim + 32], w1l=w1[n_dim + 32:], b1=b1,
        w2=w2, b2=b2, w3=w3, b3=b3,
    )


def fold_params(p, compute_dtype=jnp.bfloat16):
    """Host-side folding of chained post-ReLU linears + MXU dtype cast.

    Note: quantization (compute_dtype) is applied AFTER folding (wt2@W1t etc.
    computed in f32 then cast), so a bf16 path differs slightly from a
    layer-wise-quantized model; validated against a matching folded reference.
    """
    f32 = jnp.float32
    # Tiny-K weights for the VPU FMA path: [x-part ; label-part] -> [n_dim+n_emb, 128]
    w_xl = jnp.concatenate([p["w1x"], p["emb"] @ p["w1l"]], axis=0).astype(f32)
    return dict(
        wt1=p["wt1"].astype(f32),                                # [1, 32]  (VPU)
        bt1=p["bt1"].astype(f32),                                # [1, 32]
        wt2_w1t=(p["wt2"] @ p["w1t"]).astype(compute_dtype),     # [32, 128] (MXU)
        w_xl=w_xl,                                               # [n_small, 128] f32
        b1=(p["b1"] + p["bt2"] @ p["w1t"]).astype(f32),          # [1, 128]
        w2=p["w2"].astype(compute_dtype),                        # [128, 512]
        b2=p["b2"].astype(f32),                                  # [1, 512]
        w3=p["w3"].astype(compute_dtype),                        # [512, n_dim]
        b3=p["b3"].astype(f32),                                  # [1, n_dim]
    )


# ----------------------------------------------------------------------------
# Forward wrapper
# ----------------------------------------------------------------------------
def _round_up(v, m):
    return ((v + m - 1) // m) * m


def _auto_tile_b(B):
    """min(round_up_16(B), 512); keep >=2 grid steps when the batch allows so
    the "parallel" grid axis can be sharded across both v7x TensorCores."""
    tb = min(512, _round_up(max(B, 1), 16))
    if B > 16 and (B + tb - 1) // tb < 2:
        tb = _round_up((B + 1) // 2, 16)
    return tb


@functools.partial(jax.jit, static_argnames=("tile_b",))
def conditional_ddpm_forward(x, t, y, fp, *, tile_b=None):
    """x: [B, n_dim] f32, t: [B] numeric, y: [B] int -> predicted noise [B, n_dim] f32."""
    B, n_dim = x.shape
    f32 = jnp.float32
    n_small = fp["w_xl"].shape[0]          # n_dim + n_emb
    n_emb = n_small - n_dim

    if tile_b is None:
        tile_b = _auto_tile_b(B)
    assert tile_b % 8 == 0, "tile_b must be a multiple of 8"

    # Glue (torch: t.unsqueeze(-1).float(), y.long() -> embedding lookup as
    # one-hot); all fused into this jit.  Pack [x | onehot | t] into ONE per-row
    # input slab so each grid step issues a single input DMA.
    onehot = jax.nn.one_hot(y.astype(jnp.int32), n_emb, dtype=f32)     # [B, n_emb]
    xin = jnp.concatenate(
        [x.astype(f32), onehot, t.reshape(B, 1).astype(f32)], axis=1)  # [B, n_small+1]

    # Pad batch to a tile multiple; padded rows (all-zero, incl. zero one-hot)
    # are discarded after the call.
    n_blocks = (B + tile_b - 1) // tile_b
    bp = n_blocks * tile_b
    if bp != B:
        xin = jnp.pad(xin, ((0, bp - B), (0, 0)))

    weights = (
        fp["wt1"], fp["bt1"], fp["wt2_w1t"], fp["w_xl"], fp["b1"],
        fp["w2"], fp["b2"], fp["w3"], fp["b3"],
    )

    def batch_spec(cols):
        return pl.BlockSpec((tile_b, cols), lambda i: (i, 0))

    def resident_spec(shape):
        return pl.BlockSpec(tuple(shape), lambda i: (0, 0))

    flops = 2 * bp * (32 + 32 * 128 + n_small * 128 + 128 * 512 + 512 * n_dim)
    w_bytes = sum(int(w.size) * w.dtype.itemsize for w in weights)
    bytes_accessed = w_bytes + bp * ((n_small + 1) + n_dim) * 4

    out = pl.pallas_call(
        ddpm_kernel,
        out_shape=jax.ShapeDtypeStruct((bp, n_dim), f32),
        grid=(n_blocks,),
        in_specs=(
            [batch_spec(n_small + 1)]
            + [resident_spec(w.shape) for w in weights]
        ),
        out_specs=batch_spec(n_dim),
        compiler_params=pltpu.CompilerParams(
            dimension_semantics=("parallel",),
        ),
        cost_estimate=pl.CostEstimate(
            flops=flops, transcendentals=0, bytes_accessed=bytes_accessed),
    )(xin, *weights)

    return out[:B]


# ----------------------------------------------------------------------------
# Pure-JAX references
# ----------------------------------------------------------------------------
def reference_forward_f32(x, t, y, p):
    """Exact f32 torch-module semantics (concat formulation, unfolded params)."""
    t2 = t.reshape(-1, 1).astype(jnp.float32)
    time_emb = jnp.maximum(t2 @ p["wt1"] + p["bt1"], 0.0) @ p["wt2"] + p["bt2"]
    label_emb = p["emb"][y.astype(jnp.int32)]
    xin = jnp.concatenate([x, time_emb, label_emb], axis=1)
    w1 = jnp.concatenate([p["w1x"], p["w1t"], p["w1l"]], axis=0)
    h1 = jnp.maximum(xin @ w1 + p["b1"], 0.0)
    h2 = jnp.maximum(h1 @ p["w2"] + p["b2"], 0.0)
    return h2 @ p["w3"] + p["b3"]


def reference_forward_folded(x, t, y, fp, n_dim):
    """Mirrors the kernel's folded / mixed-precision math for tight comparison."""
    f32 = jnp.float32
    mx = fp["w2"].dtype
    n_emb = fp["w_xl"].shape[0] - n_dim
    t2 = t.reshape(-1, 1).astype(f32)
    h_t = jnp.maximum(t2 * fp["wt1"] + fp["bt1"], 0.0)
    onehot = jax.nn.one_hot(y.astype(jnp.int32), n_emb, dtype=f32)
    xoh = jnp.concatenate([x.astype(f32), onehot], axis=1)
    h1 = (
        jnp.dot(h_t.astype(mx), fp["wt2_w1t"], preferred_element_type=f32)
        + fp["b1"]
        + xoh @ fp["w_xl"]
    )
    h1 = jnp.maximum(h1, 0.0)
    h2 = jnp.maximum(
        jnp.dot(h1.astype(mx), fp["w2"], preferred_element_type=f32) + fp["b2"], 0.0)
    return jnp.dot(h2.astype(mx), fp["w3"], preferred_element_type=f32) + fp["b3"]


# ----------------------------------------------------------------------------
if __name__ == "__main__":
    n_classes, n_dim, B = 2, 3, 40   # B=40 -> auto tile 32, 2 grid steps, padding

    key = jax.random.PRNGKey(0)
    k_param, k_x, k_t, k_y = jax.random.split(key, 4)

    params = init_params(k_param, n_classes=n_classes, n_dim=n_dim)

    x = jax.random.normal(k_x, (B, n_dim), jnp.float32)
    t = jax.random.randint(k_t, (B,), 0, 200, jnp.int32)
    y = jax.random.randint(k_y, (B,), 0, n_classes + 1, jnp.int32)

    # 1) f32 parameter path: validate the kernel against exact module semantics.
    fp_f32 = fold_params(params, compute_dtype=jnp.float32)
    out_f32 = jax.block_until_ready(conditional_ddpm_forward(x, t, y, fp_f32))
    ref_exact = reference_forward_f32(x, t, y, params)
    assert out_f32.shape == (B, n_dim)
    assert jnp.allclose(out_f32, ref_exact, atol=1e-3, rtol=1e-3), \
        "mismatch vs exact f32 reference"

    # 2) bf16-weight path (perf default): compare against a pure-JAX reference
    #    that mirrors the same bf16 MXU casts with f32 accumulation.
    fp_bf16 = fold_params(params, compute_dtype=jnp.bfloat16)
    out_bf16 = jax.block_until_ready(conditional_ddpm_forward(x, t, y, fp_bf16))
    ref_q = reference_forward_folded(x, t, y, fp_bf16, n_dim)
    assert out_bf16.shape == (B, n_dim)
    assert jnp.allclose(out_bf16, ref_q, atol=2e-3, rtol=2e-3), \
        "mismatch vs bf16-folded reference"

    print("KERNEL_OK")
</pallas_src>

<mosaic_0001>
module attributes {stable_mosaic.version = 11 : i64} {
  func.func @ddpm_kernel(%arg0: i32, %arg1: memref<32x7xf32, #tpu.memory_space<vmem>>, %arg2: memref<1x32xf32, #tpu.memory_space<vmem>>, %arg3: memref<1x32xf32, #tpu.memory_space<vmem>>, %arg4: memref<32x128xf32, #tpu.memory_space<vmem>>, %arg5: memref<6x128xf32, #tpu.memory_space<vmem>>, %arg6: memref<1x128xf32, #tpu.memory_space<vmem>>, %arg7: memref<128x512xf32, #tpu.memory_space<vmem>>, %arg8: memref<1x512xf32, #tpu.memory_space<vmem>>, %arg9: memref<512x3xf32, #tpu.memory_space<vmem>>, %arg10: memref<1x3xf32, #tpu.memory_space<vmem>>, %arg11: memref<32x3xf32, #tpu.memory_space<vmem>>) attributes {dimension_semantics = [#tpu.dimension_semantics<parallel>], iteration_bounds = array<i64: 2>, scalar_prefetch = 0 : i64, scratch_operands = 0 : i64, tpu.core_type = #tpu.core_type<tc>, window_params = [{transform_indices = @transform_0, window_bounds = array<i64: 32, 7>}, {pipeline_mode = #tpu.pipeline_mode<synchronous>, transform_indices = @transform_1, window_bounds = array<i64: 1, 32>}, {pipeline_mode = #tpu.pipeline_mode<synchronous>, transform_indices = @transform_2, window_bounds = array<i64: 1, 32>}, {pipeline_mode = #tpu.pipeline_mode<synchronous>, transform_indices = @transform_3, window_bounds = array<i64: 32, 128>}, {pipeline_mode = #tpu.pipeline_mode<synchronous>, transform_indices = @transform_4, window_bounds = array<i64: 6, 128>}, {pipeline_mode = #tpu.pipeline_mode<synchronous>, transform_indices = @transform_5, window_bounds = array<i64: 1, 128>}, {pipeline_mode = #tpu.pipeline_mode<synchronous>, transform_indices = @transform_6, window_bounds = array<i64: 128, 512>}, {pipeline_mode = #tpu.pipeline_mode<synchronous>, transform_indices = @transform_7, window_bounds = array<i64: 1, 512>}, {pipeline_mode = #tpu.pipeline_mode<synchronous>, transform_indices = @transform_8, window_bounds = array<i64: 512, 3>}, {pipeline_mode = #tpu.pipeline_mode<synchronous>, transform_indices = @transform_9, window_bounds = array<i64: 1, 3>}, {transform_indices = @transform_10, window_bounds = array<i64: 32, 3>}]} {
    %c0 = arith.constant 0 : index
    %c0_0 = arith.constant 0 : index
    %0 = vector.load %arg1[%c0, %c0_0] : memref<32x7xf32, #tpu.memory_space<vmem>>, vector<32x7xf32>
    %1 = vector.extract_strided_slice %0 {offsets = [0, 6], sizes = [32, 1], strides = [1, 1]} : vector<32x7xf32> to vector<32x1xf32>
    %c0_1 = arith.constant 0 : index
    %c0_2 = arith.constant 0 : index
    %2 = vector.load %arg2[%c0_1, %c0_2] : memref<1x32xf32, #tpu.memory_space<vmem>>, vector<1x32xf32>
    %3 = vector.broadcast %1 : vector<32x1xf32> to vector<32x32xf32>
    %4 = vector.broadcast %2 : vector<1x32xf32> to vector<32x32xf32>
    %5 = arith.mulf %3, %4 : vector<32x32xf32>
    %c0_3 = arith.constant 0 : index
    %c0_4 = arith.constant 0 : index
    %6 = vector.load %arg3[%c0_3, %c0_4] : memref<1x32xf32, #tpu.memory_space<vmem>>, vector<1x32xf32>
    %7 = vector.broadcast %6 : vector<1x32xf32> to vector<32x32xf32>
    %8 = arith.addf %5, %7 : vector<32x32xf32>
    %cst = arith.constant 0.000000e+00 : f32
    %9 = vector.broadcast %cst : f32 to vector<32x32xf32>
    %10 = arith.maximumf %8, %9 : vector<32x32xf32>
    %c0_5 = arith.constant 0 : index
    %c0_6 = arith.constant 0 : index
    %11 = vector.load %arg4[%c0_5, %c0_6] : memref<32x128xf32, #tpu.memory_space<vmem>>, vector<32x128xf32>
    %cst_7 = arith.constant dense<0.000000e+00> : vector<32x128xf32>
    %12 = tpu.matmul %10, %11, %cst_7 {dimension_numbers = #tpu.dot_dimension_numbers<[1], [0], [0], [1], [0, 0, 1, 1], [], []>} : vector<32x32xf32>, vector<32x128xf32>, vector<32x128xf32> -> vector<32x128xf32>
    %c0_8 = arith.constant 0 : index
    %c0_9 = arith.constant 0 : index
    %13 = vector.load %arg6[%c0_8, %c0_9] : memref<1x128xf32, #tpu.memory_space<vmem>>, vector<1x128xf32>
    %14 = vector.broadcast %13 : vector<1x128xf32> to vector<32x128xf32>
    %15 = arith.addf %12, %14 : vector<32x128xf32>
    %16 = vector.extract_strided_slice %0 {offsets = [0, 0], sizes = [32, 1], strides = [1, 1]} : vector<32x7xf32> to vector<32x1xf32>
    %c0_10 = arith.constant 0 : index
    %c0_11 = arith.constant 0 : index
    %17 = vector.load %arg5[%c0_10, %c0_11] : memref<6x128xf32, #tpu.memory_space<vmem>>, vector<1x128xf32>
    %18 = vector.broadcast %16 : vector<32x1xf32> to vector<32x128xf32>
    %19 = vector.broadcast %17 : vector<1x128xf32> to vector<32x128xf32>
    %20 = arith.mulf %18, %19 : vector<32x128xf32>
    %21 = arith.addf %15, %20 : vector<32x128xf32>
    %22 = vector.extract_strided_slice %0 {offsets = [0, 1], sizes = [32, 1], strides = [1, 1]} : vector<32x7xf32> to vector<32x1xf32>
    %c1 = arith.constant 1 : index
    %c0_12 = arith.constant 0 : index
    %23 = vector.load %arg5[%c1, %c0_12] : memref<6x128xf32, #tpu.memory_space<vmem>>, vector<1x128xf32>
    %24 = vector.broadcast %22 : vector<32x1xf32> to vector<32x128xf32>
    %25 = vector.broadcast %23 : vector<1x128xf32> to vector<32x128xf32>
    %26 = arith.mulf %24, %25 : vector<32x128xf32>
    %27 = arith.addf %21, %26 : vector<32x128xf32>
    %28 = vector.extract_strided_slice %0 {offsets = [0, 2], sizes = [32, 1], strides = [1, 1]} : vector<32x7xf32> to vector<32x1xf32>
    %c2 = arith.constant 2 : index
    %c0_13 = arith.constant 0 : index
    %29 = vector.load %arg5[%c2, %c0_13] : memref<6x128xf32, #tpu.memory_space<vmem>>, vector<1x128xf32>
    %30 = vector.broadcast %28 : vector<32x1xf32> to vector<32x128xf32>
    %31 = vector.broadcast %29 : vector<1x128xf32> to vector<32x128xf32>
    %32 = arith.mulf %30, %31 : vector<32x128xf32>
    %33 = arith.addf %27, %32 : vector<32x128xf32>
    %34 = vector.extract_strided_slice %0 {offsets = [0, 3], sizes = [32, 1], strides = [1, 1]} : vector<32x7xf32> to vector<32x1xf32>
    %c3 = arith.constant 3 : index
    %c0_14 = arith.constant 0 : index
    %35 = vector.load %arg5[%c3, %c0_14] : memref<6x128xf32, #tpu.memory_space<vmem>>, vector<1x128xf32>
    %36 = vector.broadcast %34 : vector<32x1xf32> to vector<32x128xf32>
    %37 = vector.broadcast %35 : vector<1x128xf32> to vector<32x128xf32>
    %38 = arith.mulf %36, %37 : vector<32x128xf32>
    %39 = arith.addf %33, %38 : vector<32x128xf32>
    %40 = vector.extract_strided_slice %0 {offsets = [0, 4], sizes = [32, 1], strides = [1, 1]} : vector<32x7xf32> to vector<32x1xf32>
    %c4 = arith.constant 4 : index
    %c0_15 = arith.constant 0 : index
    %41 = vector.load %arg5[%c4, %c0_15] : memref<6x128xf32, #tpu.memory_space<vmem>>, vector<1x128xf32>
    %42 = vector.broadcast %40 : vector<32x1xf32> to vector<32x128xf32>
    %43 = vector.broadcast %41 : vector<1x128xf32> to vector<32x128xf32>
    %44 = arith.mulf %42, %43 : vector<32x128xf32>
    %45 = arith.addf %39, %44 : vector<32x128xf32>
    %46 = vector.extract_strided_slice %0 {offsets = [0, 5], sizes = [32, 1], strides = [1, 1]} : vector<32x7xf32> to vector<32x1xf32>
    %c5 = arith.constant 5 : index
    %c0_16 = arith.constant 0 : index
    %47 = vector.load %arg5[%c5, %c0_16] : memref<6x128xf32, #tpu.memory_space<vmem>>, vector<1x128xf32>
    %48 = vector.broadcast %46 : vector<32x1xf32> to vector<32x128xf32>
    %49 = vector.broadcast %47 : vector<1x128xf32> to vector<32x128xf32>
    %50 = arith.mulf %48, %49 : vector<32x128xf32>
    %51 = arith.addf %45, %50 : vector<32x128xf32>
    %cst_17 = arith.constant 0.000000e+00 : f32
    %52 = vector.broadcast %cst_17 : f32 to vector<32x128xf32>
    %53 = arith.maximumf %51, %52 : vector<32x128xf32>
    %c0_18 = arith.constant 0 : index
    %c0_19 = arith.constant 0 : index
    %54 = vector.load %arg7[%c0_18, %c0_19] : memref<128x512xf32, #tpu.memory_space<vmem>>, vector<128x512xf32>
    %cst_20 = arith.constant dense<0.000000e+00> : vector<32x512xf32>
    %55 = tpu.matmul %53, %54, %cst_20 {dimension_numbers = #tpu.dot_dimension_numbers<[1], [0], [0], [1], [0, 0, 1, 1], [], []>} : vector<32x128xf32>, vector<128x512xf32>, vector<32x512xf32> -> vector<32x512xf32>
    %c0_21 = arith.constant 0 : index
    %c0_22 = arith.constant 0 : index
    %56 = vector.load %arg8[%c0_21, %c0_22] : memref<1x512xf32, #tpu.memory_space<vmem>>, vector<1x512xf32>
    %57 = vector.broadcast %56 : vector<1x512xf32> to vector<32x512xf32>
    %58 = arith.addf %55, %57 : vector<32x512xf32>
    %cst_23 = arith.constant 0.000000e+00 : f32
    %59 = vector.broadcast %cst_23 : f32 to vector<32x512xf32>
    %60 = arith.maximumf %58, %59 : vector<32x512xf32>
    %c0_24 = arith.constant 0 : index
    %c0_25 = arith.constant 0 : index
    %61 = vector.load %arg9[%c0_24, %c0_25] : memref<512x3xf32, #tpu.memory_space<vmem>>, vector<512x3xf32>
    %cst_26 = arith.constant dense<0.000000e+00> : vector<32x3xf32>
    %62 = tpu.matmul %60, %61, %cst_26 {dimension_numbers = #tpu.dot_dimension_numbers<[1], [0], [0], [1], [0, 0, 1, 1], [], []>} : vector<32x512xf32>, vector<512x3xf32>, vector<32x3xf32> -> vector<32x3xf32>
    %c0_27 = arith.constant 0 : index
    %c0_28 = arith.constant 0 : index
    %63 = vector.load %arg10[%c0_27, %c0_28] : memref<1x3xf32, #tpu.memory_space<vmem>>, vector<1x3xf32>
    %64 = vector.broadcast %63 : vector<1x3xf32> to vector<32x3xf32>
    %65 = arith.addf %62, %64 : vector<32x3xf32>
    %c0_29 = arith.constant 0 : index
    %c0_30 = arith.constant 0 : index
    %66 = vector.load %arg11[%c0_29, %c0_30] : memref<32x3xf32, #tpu.memory_space<vmem>>, vector<32x3xf32>
    tpu.vector_store %arg11[%c0_29, %c0_30], %65 {strides = array<i32>} : memref<32x3xf32, #tpu.memory_space<vmem>>, vector<32x3xf32>,
    return
  }
  func.func @transform_0(%arg0: i32) -> (i32, i32) {
    %c0_i32 = arith.constant 0 : i32
    %c0_i32_0 = arith.constant 0 : i32
    return %arg0, %c0_i32 : i32, i32
  }
  func.func @transform_1(%arg0: i32) -> (i32, i32) {
    %c0_i32 = arith.constant 0 : i32
    %c0_i32_0 = arith.constant 0 : i32
    %c0_i32_1 = arith.constant 0 : i32
    return %c0_i32, %c0_i32_0 : i32, i32
  }
  func.func @transform_2(%arg0: i32) -> (i32, i32) {
    %c0_i32 = arith.constant 0 : i32
    %c0_i32_0 = arith.constant 0 : i32
    %c0_i32_1 = arith.constant 0 : i32
    return %c0_i32, %c0_i32_0 : i32, i32
  }
  func.func @transform_3(%arg0: i32) -> (i32, i32) {
    %c0_i32 = arith.constant 0 : i32
    %c0_i32_0 = arith.constant 0 : i32
    %c0_i32_1 = arith.constant 0 : i32
    return %c0_i32, %c0_i32_0 : i32, i32
  }
  func.func @transform_4(%arg0: i32) -> (i32, i32) {
    %c0_i32 = arith.constant 0 : i32
    %c0_i32_0 = arith.constant 0 : i32
    %c0_i32_1 = arith.constant 0 : i32
    return %c0_i32, %c0_i32_0 : i32, i32
  }
  func.func @transform_5(%arg0: i32) -> (i32, i32) {
    %c0_i32 = arith.constant 0 : i32
    %c0_i32_0 = arith.constant 0 : i32
    %c0_i32_1 = arith.constant 0 : i32
    return %c0_i32, %c0_i32_0 : i32, i32
  }
  func.func @transform_6(%arg0: i32) -> (i32, i32) {
    %c0_i32 = arith.constant 0 : i32
    %c0_i32_0 = arith.constant 0 : i32
    %c0_i32_1 = arith.constant 0 : i32
    return %c0_i32, %c0_i32_0 : i32, i32
  }
  func.func @transform_7(%arg0: i32) -> (i32, i32) {
    %c0_i32 = arith.constant 0 : i32
    %c0_i32_0 = arith.constant 0 : i32
    %c0_i32_1 = arith.constant 0 : i32
    return %c0_i32, %c0_i32_0 : i32, i32
  }
  func.func @transform_8(%arg0: i32) -> (i32, i32) {
    %c0_i32 = arith.constant 0 : i32
    %c0_i32_0 = arith.constant 0 : i32
    %c0_i32_1 = arith.constant 0 : i32
    return %c0_i32, %c0_i32_0 : i32, i32
  }
  func.func @transform_9(%arg0: i32) -> (i32, i32) {
    %c0_i32 = arith.constant 0 : i32
    %c0_i32_0 = arith.constant 0 : i32
    %c0_i32_1 = arith.constant 0 : i32
    return %c0_i32, %c0_i32_0 : i32, i32
  }
  func.func @transform_10(%arg0: i32) -> (i32, i32) {
    %c0_i32 = arith.constant 0 : i32
    %c0_i32_0 = arith.constant 0 : i32
    return %arg0, %c0_i32 : i32, i32
  }
}

</mosaic_0001>

<llo_original>
// kernel: conditional_ddpm_forward.1
$region0: #{conditional_ddpm_forward.1}
  #allocation0 [shape = 'u32[]', space=smem, size = 0x4, offset = 0x4, fixed_abs, tag = 'smem constant byte address 0x4 - core index']
  #allocation1 [shape = 'u32[72,128]{1,0:T(1,128)}', space=vmem, size = 0x9000, scoped, tag = 'internal scratch']
  %s0 = inlined_call_operand.vmem [shape: f32[64,7], index: 0, kind: input, shape index: {}]
  %s1 = inlined_call_operand.vmem [shape: f32[1,32], index: 1, kind: input, shape index: {}]
  %s2 = inlined_call_operand.vmem [shape: f32[1,32], index: 2, kind: input, shape index: {}]
  %s3 = inlined_call_operand.vmem [shape: f32[32,128], index: 3, kind: input, shape index: {}]
  %s4 = inlined_call_operand.vmem [shape: f32[6,128], index: 4, kind: input, shape index: {}]
  %s5 = inlined_call_operand.vmem [shape: f32[1,128], index: 5, kind: input, shape index: {}]
  %s6 = inlined_call_operand.vmem [shape: f32[128,512], index: 6, kind: input, shape index: {}]
  %s7 = inlined_call_operand.vmem [shape: f32[1,512], index: 7, kind: input, shape index: {}]
  %s8 = inlined_call_operand.vmem [shape: f32[512,3], index: 8, kind: input, shape index: {}]
  %s9 = inlined_call_operand.vmem [shape: f32[1,3], index: 9, kind: input, shape index: {}]
  %s10 = inlined_call_operand.vmem [shape: f32[64,3], index: 10, kind: output, shape index: {}]
  %s11 = sld [smem:[#allocation0]]
  $region73: #{conditional_ddpm_forward.1} parent=0
    _
  %s13 = ssub.s32 1, %s11
  %s14 = scalar_select 0, %s13, %s11
  loop: start=0, step=1, limit=4
  $region2: #{conditional_ddpm_forward.1} parent=0 // loop_pre_header
    _
  $region3: #{conditional_ddpm_forward.1} parent=0 // loop_header
    %s16 = sphi 0, %s20
    %p17 = scmp.ge.s32.totalorder %s16, 4
    %s26 = sphi 0, %s28
    %s29 = sphi 0, %s26
    %s30 = sphi 0, %s29
    %s46 = sphi 0, %s30
    %s50 = sphi 0, %s50
    %s52 = sphi 0, %s50
    %s53 = sphi 0, %s52
    %s67 = sphi 0, %s53
    %s71 = sphi 0, %s71
    %s73 = sphi 0, %s71
    %s74 = sphi 0, %s73
    %s88 = sphi 0, %s74
    %s92 = sphi 0, %s92
    %s94 = sphi 0, %s92
    %s95 = sphi 0, %s94
    %s109 = sphi 0, %s95
    %s113 = sphi 0, %s113
    %s115 = sphi 0, %s113
    %s116 = sphi 0, %s115
    %s130 = sphi 0, %s116
    %s134 = sphi 0, %s134
    %s136 = sphi 0, %s134
    %s137 = sphi 0, %s136
    %s151 = sphi 0, %s137
    %s155 = sphi 0, %s155
    %s157 = sphi 0, %s155
    %s158 = sphi 0, %s157
    %s172 = sphi 0, %s158
    %s176 = sphi 0, %s176
    %s178 = sphi 0, %s176
    %s179 = sphi 0, %s178
    %s193 = sphi 0, %s179
    %s197 = sphi 0, %s197
    %s199 = sphi 0, %s197
    %s200 = sphi 0, %s199
    %s214 = sphi 0, %s200
    %s218 = sphi 0, %s218
    %s220 = sphi 0, %s218
    %s221 = sphi 0, %s220
    %s235 = sphi 0, %s221
    %s241 = sphi 0, %s243
    %s244 = sphi 0, %s241
    %s245 = sphi 0, %s244
    %s261 = sphi 0, %s245
  $region4: #{conditional_ddpm_forward.1} parent=0 // loop_header_branch
    %19 = sbr.rel (%p17) target = $region8
  $region5: #{conditional_ddpm_forward.1} parent=0 // loop_body
    %s21 = ssub.s32 %s16, 1
    %s22 = ssub.s32 %s16, 2
    %s23 = sadd.s32 %s16, 1
    %s24 = ssub.s32 %s16, %s23
    %p25 = scmp.eq.s32.totalorder %s24, 0
    %s27 = sadd.s32 %s26, 1
    %s28 = scalar_select %p25, %s26, %s27
    %p31 = pneg %p25
    %p32 = scmp.eq.s32.totalorder %s16, 1
    %p33 = por %p31, %p32
    %p34 = scmp.ne.s32.totalorder %s26, %s29
    %p35 = scmp.eq.s32.totalorder %s16, 0
    %p36 = por %p34, %p35
    %p37 = scmp.ne.s32.totalorder %s26, %s29
    %p38 = scmp.eq.s32.totalorder %s21, 1
    %p39 = por %p37, %p38
    %p40 = scmp.ne.s32.totalorder %s29, %s30
    %p41 = scmp.eq.s32.totalorder %s21, 0
    %p42 = por %p40, %p41
    %p43 = scmp.ne.s32.totalorder %s29, %s30
    %p44 = scmp.eq.s32.totalorder %s22, 1
    %p45 = por %p43, %p44
    %p47 = scmp.ne.s32.totalorder %s30, %s46
    %p48 = scmp.eq.s32.totalorder %s22, 0
    %p49 = por %p47, %p48
    %s51 = sadd.s32 %s50, 1
    %p54 = scmp.eq.s32.totalorder %s16, 1
    %p55 = scmp.ne.s32.totalorder %s50, %s52
    %p56 = scmp.eq.s32.totalorder %s16, 0
    %p57 = por %p55, %p56
    %p58 = scmp.ne.s32.totalorder %s50, %s52
    %p59 = scmp.eq.s32.totalorder %s21, 1
    %p60 = por %p58, %p59
    %p61 = scmp.ne.s32.totalorder %s52, %s53
    %p62 = scmp.eq.s32.totalorder %s21, 0
    %p63 = por %p61, %p62
    %p64 = scmp.ne.s32.totalorder %s52, %s53
    %p65 = scmp.eq.s32.totalorder %s22, 1
    %p66 = por %p64, %p65
    %p68 = scmp.ne.s32.totalorder %s53, %s67
    %p69 = scmp.eq.s32.totalorder %s22, 0
    %p70 = por %p68, %p69
    %s72 = sadd.s32 %s71, 1
    %p75 = scmp.eq.s32.totalorder %s16, 1
    %p76 = scmp.ne.s32.totalorder %s71, %s73
    %p77 = scmp.eq.s32.totalorder %s16, 0
    %p78 = por %p76, %p77
    %p79 = scmp.ne.s32.totalorder %s71, %s73
    %p80 = scmp.eq.s32.totalorder %s21, 1
    %p81 = por %p79, %p80
    %p82 = scmp.ne.s32.totalorder %s73, %s74
    %p83 = scmp.eq.s32.totalorder %s21, 0
    %p84 = por %p82, %p83
    %p85 = scmp.ne.s32.totalorder %s73, %s74
    %p86 = scmp.eq.s32.totalorder %s22, 1
    %p87 = por %p85, %p86
    %p89 = scmp.ne.s32.totalorder %s74, %s88
    %p90 = scmp.eq.s32.totalorder %s22, 0
    %p91 = por %p89, %p90
    %s93 = sadd.s32 %s92, 1
    %p96 = scmp.eq.s32.totalorder %s16, 1
    %p97 = scmp.ne.s32.totalorder %s92, %s94
    %p98 = scmp.eq.s32.totalorder %s16, 0
    %p99 = por %p97, %p98
    %p100 = scmp.ne.s32.totalorder %s92, %s94
    %p101 = scmp.eq.s32.totalorder %s21, 1
    %p102 = por %p100, %p101
    %p103 = scmp.ne.s32.totalorder %s94, %s95
    %p104 = scmp.eq.s32.totalorder %s21, 0
    %p105 = por %p103, %p104
    %p106 = scmp.ne.s32.totalorder %s94, %s95
    %p107 = scmp.eq.s32.totalorder %s22, 1
    %p108 = por %p106, %p107
    %p110 = scmp.ne.s32.totalorder %s95, %s109
    %p111 = scmp.eq.s32.totalorder %s22, 0
    %p112 = por %p110, %p111
    %s114 = sadd.s32 %s113, 1
    %p117 = scmp.eq.s32.totalorder %s16, 1
    %p118 = scmp.ne.s32.totalorder %s113, %s115
    %p119 = scmp.eq.s32.totalorder %s16, 0
    %p120 = por %p118, %p119
    %p121 = scmp.ne.s32.totalorder %s113, %s115
    %p122 = scmp.eq.s32.totalorder %s21, 1
    %p123 = por %p121, %p122
    %p124 = scmp.ne.s32.totalorder %s115, %s116
    %p125 = scmp.eq.s32.totalorder %s21, 0
    %p126 = por %p124, %p125
    %p127 = scmp.ne.s32.totalorder %s115, %s116
    %p128 = scmp.eq.s32.totalorder %s22, 1
    %p129 = por %p127, %p128
    %p131 = scmp.ne.s32.totalorder %s116, %s130
    %p132 = scmp.eq.s32.totalorder %s22, 0
    %p133 = por %p131, %p132
    %s135 = sadd.s32 %s134, 1
    %p138 = scmp.eq.s32.totalorder %s16, 1
    %p139 = scmp.ne.s32.totalorder %s134, %s136
    %p140 = scmp.eq.s32.totalorder %s16, 0
    %p141 = por %p139, %p140
    %p142 = scmp.ne.s32.totalorder %s134, %s136
    %p143 = scmp.eq.s32.totalorder %s21, 1
    %p144 = por %p142, %p143
    %p145 = scmp.ne.s32.totalorder %s136, %s137
    %p146 = scmp.eq.s32.totalorder %s21, 0
    %p147 = por %p145, %p146
    %p148 = scmp.ne.s32.totalorder %s136, %s137
    %p149 = scmp.eq.s32.totalorder %s22, 1
    %p150 = por %p148, %p149
    %p152 = scmp.ne.s32.totalorder %s137, %s151
    %p153 = scmp.eq.s32.totalorder %s22, 0
    %p154 = por %p152, %p153
    %s156 = sadd.s32 %s155, 1
    %p159 = scmp.eq.s32.totalorder %s16, 1
    %p160 = scmp.ne.s32.totalorder %s155, %s157
    %p161 = scmp.eq.s32.totalorder %s16, 0
    %p162 = por %p160, %p161
    %p163 = scmp.ne.s32.totalorder %s155, %s157
    %p164 = scmp.eq.s32.totalorder %s21, 1
    %p165 = por %p163, %p164
    %p166 = scmp.ne.s32.totalorder %s157, %s158
    %p167 = scmp.eq.s32.totalorder %s21, 0
    %p168 = por %p166, %p167
    %p169 = scmp.ne.s32.totalorder %s157, %s158
    %p170 = scmp.eq.s32.totalorder %s22, 1
    %p171 = por %p169, %p170
    %p173 = scmp.ne.s32.totalorder %s158, %s172
    %p174 = scmp.eq.s32.totalorder %s22, 0
    %p175 = por %p173, %p174
    %s177 = sadd.s32 %s176, 1
    %p180 = scmp.eq.s32.totalorder %s16, 1
    %p181 = scmp.ne.s32.totalorder %s176, %s178
    %p182 = scmp.eq.s32.totalorder %s16, 0
    %p183 = por %p181, %p182
    %p184 = scmp.ne.s32.totalorder %s176, %s178
    %p185 = scmp.eq.s32.totalorder %s21, 1
    %p186 = por %p184, %p185
    %p187 = scmp.ne.s32.totalorder %s178, %s179
    %p188 = scmp.eq.s32.totalorder %s21, 0
    %p189 = por %p187, %p188
    %p190 = scmp.ne.s32.totalorder %s178, %s179
    %p191 = scmp.eq.s32.totalorder %s22, 1
    %p192 = por %p190, %p191
    %p194 = scmp.ne.s32.totalorder %s179, %s193
    %p195 = scmp.eq.s32.totalorder %s22, 0
    %p196 = por %p194, %p195
    %s198 = sadd.s32 %s197, 1
    %p201 = scmp.eq.s32.totalorder %s16, 1
    %p202 = scmp.ne.s32.totalorder %s197, %s199
    %p203 = scmp.eq.s32.totalorder %s16, 0
    %p204 = por %p202, %p203
    %p205 = scmp.ne.s32.totalorder %s197, %s199
    %p206 = scmp.eq.s32.totalorder %s21, 1
    %p207 = por %p205, %p206
    %p208 = scmp.ne.s32.totalorder %s199, %s200
    %p209 = scmp.eq.s32.totalorder %s21, 0
    %p210 = por %p208, %p209
    %p211 = scmp.ne.s32.totalorder %s199, %s200
    %p212 = scmp.eq.s32.totalorder %s22, 1
    %p213 = por %p211, %p212
    %p215 = scmp.ne.s32.totalorder %s200, %s214
    %p216 = scmp.eq.s32.totalorder %s22, 0
    %p217 = por %p215, %p216
    %s219 = sadd.s32 %s218, 1
    %p222 = scmp.eq.s32.totalorder %s16, 1
    %p223 = scmp.ne.s32.totalorder %s218, %s220
    %p224 = scmp.eq.s32.totalorder %s16, 0
    %p225 = por %p223, %p224
    %p226 = scmp.ne.s32.totalorder %s218, %s220
    %p227 = scmp.eq.s32.totalorder %s21, 1
    %p228 = por %p226, %p227
    %p229 = scmp.ne.s32.totalorder %s220, %s221
    %p230 = scmp.eq.s32.totalorder %s21, 0
    %p231 = por %p229, %p230
    %p232 = scmp.ne.s32.totalorder %s220, %s221
    %p233 = scmp.eq.s32.totalorder %s22, 1
    %p234 = por %p232, %p233
    %p236 = scmp.ne.s32.totalorder %s221, %s235
    %p237 = scmp.eq.s32.totalorder %s22, 0
    %p238 = por %p236, %p237
    %s239 = ssub.s32 %s16, %s23
    %p240 = scmp.eq.s32.totalorder %s239, 0
    %s242 = sadd.s32 %s241, 1
    %s243 = scalar_select %p240, %s241, %s242
    %p246 = pneg %p240
    %p247 = scmp.eq.s32.totalorder %s16, 1
    %p248 = por %p246, %p247
    %p249 = scmp.ne.s32.totalorder %s241, %s244
    %p250 = scmp.eq.s32.totalorder %s16, 0
    %p251 = por %p249, %p250
    %p252 = scmp.ne.s32.totalorder %s241, %s244
    %p253 = scmp.eq.s32.totalorder %s21, 1
    %p254 = por %p252, %p253
    %p255 = scmp.ne.s32.totalorder %s244, %s245
    %p256 = scmp.eq.s32.totalorder %s21, 0
    %p257 = por %p255, %p256
    %p258 = scmp.ne.s32.totalorder %s244, %s245
    %p259 = scmp.eq.s32.totalorder %s22, 1
    %p260 = por %p258, %p259
    %p262 = scmp.ne.s32.totalorder %s245, %s261
    %p263 = scmp.eq.s32.totalorder %s22, 0
    %p264 = por %p262, %p263
    %p265 = scmp.le.s32.totalorder 1, %s16
    %p266 = scmp.lt.s32.totalorder %s16, 3
    %p267 = pnand %p265, %p266
    %p268 = pneg %p267
    // Predicated region
    $region9: #{conditional_ddpm_forward.1} parent=5 // pred_check
      _
    $region10: #{conditional_ddpm_forward.1} parent=5 // pred_check_branch
      %270 = sbr.rel (%p267) target = $region12
    $region11: #{conditional_ddpm_forward.1} parent=5 // pred_region
      %s271 = ssub.s32 %s16, 1
      // Predicated region
      $region13: #{conditional_ddpm_forward.1} parent=11 // pred_check
        %p272 = pneg %p63
      $region14: #{conditional_ddpm_forward.1} parent=11 // pred_check_branch
        %274 = sbr.rel (%p272) target = $region16
      $region15: #{conditional_ddpm_forward.1} parent=11 // pred_region
        _
      $region16: #{conditional_ddpm_forward.1} parent=11 // pred_fallthru
        _
      // Predicated region
      $region17: #{conditional_ddpm_forward.1} parent=11 // pred_check
        %p275 = pneg %p84
      $region18: #{conditional_ddpm_forward.1} parent=11 // pred_check_branch
        %277 = sbr.rel (%p275) target = $region20
      $region19: #{conditional_ddpm_forward.1} parent=11 // pred_region
        _
      $region20: #{conditional_ddpm_forward.1} parent=11 // pred_fallthru
        _
      // Predicated region
      $region21: #{conditional_ddpm_forward.1} parent=11 // pred_check
        %p278 = pneg %p105
      $region22: #{conditional_ddpm_forward.1} parent=11 // pred_check_branch
        %280 = sbr.rel (%p278) target = $region24
      $region23: #{conditional_ddpm_forward.1} parent=11 // pred_region
        _
      $region24: #{conditional_ddpm_forward.1} parent=11 // pred_fallthru
        _
      // Predicated region
      $region25: #{conditional_ddpm_forward.1} parent=11 // pred_check
        %p281 = pneg %p126
      $region26: #{conditional_ddpm_forward.1} parent=11 // pred_check_branch
        %283 = sbr.rel (%p281) target = $region28
      $region27: #{conditional_ddpm_forward.1} parent=11 // pred_region
        _
      $region28: #{conditional_ddpm_forward.1} parent=11 // pred_fallthru
        _
      // Predicated region
      $region29: #{conditional_ddpm_forward.1} parent=11 // pred_check
        %p284 = pneg %p147
      $region30: #{conditional_ddpm_forward.1} parent=11 // pred_check_branch
        %286 = sbr.rel (%p284) target = $region32
      $region31: #{conditional_ddpm_forward.1} parent=11 // pred_region
        _
      $region32: #{conditional_ddpm_forward.1} parent=11 // pred_fallthru
        _
      // Predicated region
      $region33: #{conditional_ddpm_forward.1} parent=11 // pred_check
        %p287 = pneg %p168
      $region34: #{conditional_ddpm_forward.1} parent=11 // pred_check_branch
        %289 = sbr.rel (%p287) target = $region36
      $region35: #{conditional_ddpm_forward.1} parent=11 // pred_region
        _
      $region36: #{conditional_ddpm_forward.1} parent=11 // pred_fallthru
        _
      // Predicated region
      $region37: #{conditional_ddpm_forward.1} parent=11 // pred_check
        %p290 = pneg %p189
      $region38: #{conditional_ddpm_forward.1} parent=11 // pred_check_branch
        %292 = sbr.rel (%p290) target = $region40
      $region39: #{conditional_ddpm_forward.1} parent=11 // pred_region
        _
      $region40: #{conditional_ddpm_forward.1} parent=11 // pred_fallthru
        _
      // Predicated region
      $region41: #{conditional_ddpm_forward.1} parent=11 // pred_check
        %p293 = pneg %p210
      $region42: #{conditional_ddpm_forward.1} parent=11 // pred_check_branch
        %295 = sbr.rel (%p293) target = $region44
      $region43: #{conditional_ddpm_forward.1} parent=11 // pred_region
        _
      $region44: #{conditional_ddpm_forward.1} parent=11 // pred_fallthru
        _
      // Predicated region
      $region45: #{conditional_ddpm_forward.1} parent=11 // pred_check
        %p296 = pneg %p231
      $region46: #{conditional_ddpm_forward.1} parent=11 // pred_check_branch
        %298 = sbr.rel (%p296) target = $region48
      $region47: #{conditional_ddpm_forward.1} parent=11 // pred_region
        _
      $region48: #{conditional_ddpm_forward.1} parent=11 // pred_fallthru
        _
    $region12: #{conditional_ddpm_forward.1} parent=5 // pred_fallthru
      _
    %p299 = scmp.lt.s32.totalorder %s16, 2
    // Predicated region
    $region49: #{conditional_ddpm_forward.1} parent=5 // pred_check
      %p300 = pneg %p299
    $region50: #{conditional_ddpm_forward.1} parent=5 // pred_check_branch
      %302 = sbr.rel (%p300) target = $region52
    $region51: #{conditional_ddpm_forward.1} parent=5 // pred_region
      // Predicated region
      $region53: #{conditional_ddpm_forward.1} parent=51 // pred_check
        %p303 = pneg %p36
      $region54: #{conditional_ddpm_forward.1} parent=51 // pred_check_branch
        %305 = sbr.rel (%p303) target = $region56
      $region55: #{conditional_ddpm_forward.1} parent=51 // pred_region
        %s306 = smul.u32 4, %s16
        %p307 = scmp.lt.s32.totalorder %s306, 7
        %s308 = scalar_select %p307, %s306, 7
        %s309 = smul.addr %s308, 8
        %s310 = scalar_lea.vmem %s0, %s309
        %s311 = smul.u32 4, %s16
      $region56: #{conditional_ddpm_forward.1} parent=51 // pred_fallthru
        _
    $region52: #{conditional_ddpm_forward.1} parent=5 // pred_fallthru
      _
    %p312 = scmp.le.s32.totalorder 1, %s16
    %p313 = scmp.lt.s32.totalorder %s16, 3
    %p314 = pnand %p312, %p313
    %p315 = pneg %p314
    // Predicated region
    $region57: #{conditional_ddpm_forward.1} parent=5 // pred_check
      _
    $region58: #{conditional_ddpm_forward.1} parent=5 // pred_check_branch
      %317 = sbr.rel (%p314) target = $region60
    $region59: #{conditional_ddpm_forward.1} parent=5 // pred_region
      %s318 = ssub.s32 %s16, 1
      %s319 = smul.u32 4, %s21
      %p320 = scmp.lt.s32.totalorder %s319, 7
      %s321 = scalar_select %p320, %s319, 7
      %s322 = smul.addr %s321, 8
      %s323 = scalar_lea.vmem %s0, %s322
      %p324 = pneg %p42
      %p325 = pneg %p39
      %p326 = pneg %p63
      %p327 = pneg %p60
      %p328 = pneg %p84
      %p329 = pneg %p81
      %p330 = pneg %p105
      %p331 = pneg %p102
      %p332 = pneg %p126
      %p333 = pneg %p123
      %p334 = pneg %p147
      %p335 = pneg %p144
      %p336 = pneg %p168
      %p337 = pneg %p165
      %p338 = pneg %p189
      %p339 = pneg %p186
      %p340 = pneg %p210
      %p341 = pneg %p207
      %p342 = pneg %p231
      %p343 = pneg %p228
      %p344 = pneg %p257
      %p345 = pneg %p254
      %s346 = smul.u32 4, %s21
      %p347 = scmp.lt.s32.totalorder %s346, 7
      %s348 = scalar_select %p347, %s346, 7
      %s349 = smul.addr %s348, 8
      %s350 = scalar_lea.vmem %s10, %s349
      %s351 = smul.u32 4, %s21
      %p352 = scmp.lt.s32.totalorder %s351, 7
      %s353 = scalar_select %p352, %s351, 7
      %s354 = smul.addr %s353, 8
      %s355 = scalar_lea.vmem %s0, %s354
      %s356 = smul.u32 4, %s21
      %s357 = smul.u32 4, %s21
      %p358 = scmp.lt.s32.totalorder %s357, 7
      %s359 = scalar_select %p358, %s357, 7
      %s360 = smul.addr %s359, 8
      %s361 = scalar_lea.vmem %s10, %s360
      %s362 = smul.u32 4, %s21
      %v363 = vld [vmem:[%s355] sm:$0xff]
      %v364 = vld [vmem:[%s355 + $0x8] sm:$0xff]
      %v365 = vld [vmem:[%s355 + $0x10] sm:$0xff]
      %v366 = vld [vmem:[%s355 + $0x18] sm:$0xff]
      %v367 = vld [vmem:[%s1] sm:$0x1]
      %369 = vset.pattern.permute.xlu0 6
      %370 = vperm.xlu0 %369, %v363
      %v371 = vpop.permute.xlu0 %370
      %374 = vset.pattern.permute.xlu0 6
      %375 = vperm.xlu0 %374, %v364
      %v376 = vpop.permute.xlu0 %375
      %379 = vset.pattern.permute.xlu0 6
      %380 = vperm.xlu0 %379, %v365
      %v381 = vpop.permute.xlu0 %380
      %384 = vset.pattern.permute.xlu0 6
      %385 = vperm.xlu0 %384, %v366
      %v386 = vpop.permute.xlu0 %385
      %v389 = vperm.slane %v367, 0
      %v391 = vmul.f32 %v371, %v389
      %v392 = vmul.f32 %v376, %v389
      %v393 = vmul.f32 %v381, %v389
      %v394 = vmul.f32 %v386, %v389
      %v395 = vld [vmem:[%s2] sm:$0x1]
      %v397 = vperm.slane %v395, 0
      %v399 = vadd.f32 %v391, %v397
      %v400 = vadd.f32 %v392, %v397
      %v401 = vadd.f32 %v393, %v397
      %v402 = vadd.f32 %v394, %v397
      %v403 = vmax.f32 %v399, 0.0
      %v404 = vmax.f32 %v400, 0.0
      %v405 = vmax.f32 %v401, 0.0
      %v406 = vmax.f32 %v402, 0.0
      %v407 = vld [vmem:[%s3] sm:$0xff]
      %v408 = vld [vmem:[%s3 + $0x8] sm:$0xff]
      %v409 = vld [vmem:[%s3 + $0x10] sm:$0xff]
      %v410 = vld [vmem:[%s3 + $0x18] sm:$0xff]
      %v411 = vld [vmem:[%s5] sm:$0x1]
      %v413 = vperm.slane %v411, 0
      %vm415 = vcmask 261120
      %v417 = vsel %vm415, %v403, 0
      %v420 = vsel %vm415, %v404, 0
      %v423 = vsel %vm415, %v405, 0
      %v426 = vsel %vm415, %v406, 0
      %428 = vmatpush.msra.mxu0 0.0
      %429 = vmatpush.msra.mxu0 0.0
      %430 = vmatpush.msra.mxu0 0.0
      %431 = vmatpush.msra.mxu0 0.0
      %432 = vmatpush.msra.mxu0 0.0
      %433 = vmatpush.msra.mxu0 0.0
      %434 = vmatpush.msra.mxu0 0.0
      %435 = vmatpush.msra.mxu0 0.0
      %436 = vmatpush.msra.mxu0 0.0
      %437 = vmatpush.msra.mxu0 0.0
      %438 = vmatpush.msra.mxu0 0.0
      %439 = vmatpush.msra.mxu0 0.0
      %440 = vmatpush.msra.mxu0 %v410
      %441 = vmatpush.msra.mxu0 %v409
      %442 = vmatpush.msra.mxu0 %v408
      %443 = vmatpush.msra.mxu0 %v407
      %444 = vmatmul.f32.gmra.mxu0 %v417
      %v445 = vpop.f32.mrf.mxu0
      %v446 = vadd.f32 %v413, %v445
      %447 = vmatmul.f32.gmra.mxu0 %v420
      %v448 = vpop.f32.mrf.mxu0
      %v449 = vadd.f32 %v413, %v448
      %450 = vmatmul.f32.gmra.mxu0 %v423
      %v451 = vpop.f32.mrf.mxu0
      %v452 = vadd.f32 %v413, %v451
      %453 = vmatmul.f32.gmra.mxu0 %v426
      %v454 = vpop.f32.mrf.mxu0
      %v455 = vadd.f32 %v413, %v454
      %456 = vdwg.mxu0
      %v457 = vld [vmem:[%s4] sm:$0x1]
      %458 = vset.pattern.permute.xlu0 0
      %459 = vperm.xlu0 %458, %v363
      %v460 = vpop.permute.xlu0 %459
      %462 = vset.pattern.permute.xlu0 0
      %463 = vperm.xlu0 %462, %v364
      %v464 = vpop.permute.xlu0 %463
      %466 = vset.pattern.permute.xlu0 0
      %467 = vperm.xlu0 %466, %v365
      %v468 = vpop.permute.xlu0 %467
      %470 = vset.pattern.permute.xlu0 0
      %471 = vperm.xlu0 %470, %v366
      %v472 = vpop.permute.xlu0 %471
      %v474 = vperm.slane %v457, 0
      %v475 = vmul.f32 %v460, %v474
      %v476 = vmul.f32 %v464, %v474
      %v477 = vmul.f32 %v468, %v474
      %v478 = vmul.f32 %v472, %v474
      %v479 = vadd.f32 %v446, %v475
      %v480 = vadd.f32 %v449, %v476
      %v481 = vadd.f32 %v452, %v477
      %v482 = vadd.f32 %v455, %v478
      %v483 = vld [vmem:[%s4 + $0x1] sm:$0x1]
      %484 = vset.pattern.permute.xlu0 1
      %485 = vperm.xlu0 %484, %v363
      %v486 = vpop.permute.xlu0 %485
      %488 = vset.pattern.permute.xlu0 1
      %489 = vperm.xlu0 %488, %v364
      %v490 = vpop.permute.xlu0 %489
      %492 = vset.pattern.permute.xlu0 1
      %493 = vperm.xlu0 %492, %v365
      %v494 = vpop.permute.xlu0 %493
      %496 = vset.pattern.permute.xlu0 1
      %497 = vperm.xlu0 %496, %v366
      %v498 = vpop.permute.xlu0 %497
      %v500 = vperm.slane %v483, 0
      %v501 = vmul.f32 %v486, %v500
      %v502 = vmul.f32 %v490, %v500
      %v503 = vmul.f32 %v494, %v500
      %v504 = vmul.f32 %v498, %v500
      %v505 = vadd.f32 %v479, %v501
      %v506 = vadd.f32 %v480, %v502
      %v507 = vadd.f32 %v481, %v503
      %v508 = vadd.f32 %v482, %v504
      %v509 = vld [vmem:[%s4 + $0x2] sm:$0x1]
      %510 = vset.pattern.permute.xlu0 2
      %511 = vperm.xlu0 %510, %v363
      %v512 = vpop.permute.xlu0 %511
      %514 = vset.pattern.permute.xlu0 2
      %515 = vperm.xlu0 %514, %v364
      %v516 = vpop.permute.xlu0 %515
      %518 = vset.pattern.permute.xlu0 2
      %519 = vperm.xlu0 %518, %v365
      %v520 = vpop.permute.xlu0 %519
      %522 = vset.pattern.permute.xlu0 2
      %523 = vperm.xlu0 %522, %v366
      %v524 = vpop.permute.xlu0 %523
      %v526 = vperm.slane %v509, 0
      %v527 = vmul.f32 %v512, %v526
      %v528 = vmul.f32 %v516, %v526
      %v529 = vmul.f32 %v520, %v526
      %v530 = vmul.f32 %v524, %v526
      %v531 = vadd.f32 %v505, %v527
      %v532 = vadd.f32 %v506, %v528
      %v533 = vadd.f32 %v507, %v529
      %v534 = vadd.f32 %v508, %v530
      %v535 = vld [vmem:[%s4 + $0x3] sm:$0x1]
      %536 = vset.pattern.permute.xlu0 3
      %537 = vperm.xlu0 %536, %v363
      %v538 = vpop.permute.xlu0 %537
      %540 = vset.pattern.permute.xlu0 3
      %541 = vperm.xlu0 %540, %v364
      %v542 = vpop.permute.xlu0 %541
      %544 = vset.pattern.permute.xlu0 3
      %545 = vperm.xlu0 %544, %v365
      %v546 = vpop.permute.xlu0 %545
      %548 = vset.pattern.permute.xlu0 3
      %549 = vperm.xlu0 %548, %v366
      %v550 = vpop.permute.xlu0 %549
      %v552 = vperm.slane %v535, 0
      %v553 = vmul.f32 %v538, %v552
      %v554 = vmul.f32 %v542, %v552
      %v555 = vmul.f32 %v546, %v552
      %v556 = vmul.f32 %v550, %v552
      %v557 = vadd.f32 %v531, %v553
      %v558 = vadd.f32 %v532, %v554
      %v559 = vadd.f32 %v533, %v555
      %v560 = vadd.f32 %v534, %v556
      %v561 = vld [vmem:[%s4 + $0x4] sm:$0x1]
      %562 = vset.pattern.permute.xlu0 4
      %563 = vperm.xlu0 %562, %v363
      %v564 = vpop.permute.xlu0 %563
      %566 = vset.pattern.permute.xlu0 4
      %567 = vperm.xlu0 %566, %v364
      %v568 = vpop.permute.xlu0 %567
      %570 = vset.pattern.permute.xlu0 4
      %571 = vperm.xlu0 %570, %v365
      %v572 = vpop.permute.xlu0 %571
      %574 = vset.pattern.permute.xlu0 4
      %575 = vperm.xlu0 %574, %v366
      %v576 = vpop.permute.xlu0 %575
      %v578 = vperm.slane %v561, 0
      %v579 = vmul.f32 %v564, %v578
      %v580 = vmul.f32 %v568, %v578
      %v581 = vmul.f32 %v572, %v578
      %v582 = vmul.f32 %v576, %v578
      %v583 = vadd.f32 %v557, %v579
      %v584 = vadd.f32 %v558, %v580
      %v585 = vadd.f32 %v559, %v581
      %v586 = vadd.f32 %v560, %v582
      %v587 = vld [vmem:[%s4 + $0x5] sm:$0x1]
      %588 = vset.pattern.permute.xlu0 5
      %589 = vperm.xlu0 %588, %v363
      %v590 = vpop.permute.xlu0 %589
      %592 = vset.pattern.permute.xlu0 5
      %593 = vperm.xlu0 %592, %v364
      %v594 = vpop.permute.xlu0 %593
      %596 = vset.pattern.permute.xlu0 5
      %597 = vperm.xlu0 %596, %v365
      %v598 = vpop.permute.xlu0 %597
      %600 = vset.pattern.permute.xlu0 5
      %601 = vperm.xlu0 %600, %v366
      %v602 = vpop.permute.xlu0 %601
      %v604 = vperm.slane %v587, 0
      %v605 = vmul.f32 %v590, %v604
      %v606 = vmul.f32 %v594, %v604
      %v607 = vmul.f32 %v598, %v604
      %v608 = vmul.f32 %v602, %v604
      %v609 = vadd.f32 %v583, %v605
      %v610 = vadd.f32 %v584, %v606
      %v611 = vadd.f32 %v585, %v607
      %v612 = vadd.f32 %v586, %v608
      %v613 = vmax.f32 %v609, 0.0
      %v614 = vmax.f32 %v610, 0.0
      %v615 = vmax.f32 %v611, 0.0
      %v616 = vmax.f32 %v612, 0.0
      %v617 = vld [vmem:[%s6] sm:$0xff]
      %v618 = vld [vmem:[%s6 + $0x8] sm:$0xff]
      %v619 = vld [vmem:[%s6 + $0x10] sm:$0xff]
      %v620 = vld [vmem:[%s6 + $0x18] sm:$0xff]
      %v621 = vld [vmem:[%s6 + $0x20] sm:$0xff]
      %v622 = vld [vmem:[%s6 + $0x28] sm:$0xff]
      %v623 = vld [vmem:[%s6 + $0x30] sm:$0xff]
      %v624 = vld [vmem:[%s6 + $0x38] sm:$0xff]
      %v625 = vld [vmem:[%s6 + $0x40] sm:$0xff]
      %v626 = vld [vmem:[%s6 + $0x48] sm:$0xff]
      %v627 = vld [vmem:[%s6 + $0x50] sm:$0xff]
      %v628 = vld [vmem:[%s6 + $0x58] sm:$0xff]
      %v629 = vld [vmem:[%s6 + $0x60] sm:$0xff]
      %v630 = vld [vmem:[%s6 + $0x68] sm:$0xff]
      %v631 = vld [vmem:[%s6 + $0x70] sm:$0xff]
      %v632 = vld [vmem:[%s6 + $0x78] sm:$0xff]
      %v633 = vld [vmem:[%s6 + $0x80] sm:$0xff]
      %v634 = vld [vmem:[%s6 + $0x88] sm:$0xff]
      %v635 = vld [vmem:[%s6 + $0x90] sm:$0xff]
      %v636 = vld [vmem:[%s6 + $0x98] sm:$0xff]
      %v637 = vld [vmem:[%s6 + $0xa0] sm:$0xff]
      %v638 = vld [vmem:[%s6 + $0xa8] sm:$0xff]
      %v639 = vld [vmem:[%s6 + $0xb0] sm:$0xff]
      %v640 = vld [vmem:[%s6 + $0xb8] sm:$0xff]
      %v641 = vld [vmem:[%s6 + $0xc0] sm:$0xff]
      %v642 = vld [vmem:[%s6 + $0xc8] sm:$0xff]
      %v643 = vld [vmem:[%s6 + $0xd0] sm:$0xff]
      %v644 = vld [vmem:[%s6 + $0xd8] sm:$0xff]
      %v645 = vld [vmem:[%s6 + $0xe0] sm:$0xff]
      %v646 = vld [vmem:[%s6 + $0xe8] sm:$0xff]
      %v647 = vld [vmem:[%s6 + $0xf0] sm:$0xff]
      %v648 = vld [vmem:[%s6 + $0xf8] sm:$0xff]
      %v649 = vld [vmem:[%s6 + $0x100] sm:$0xff]
      %v650 = vld [vmem:[%s6 + $0x108] sm:$0xff]
      %v651 = vld [vmem:[%s6 + $0x110] sm:$0xff]
      %v652 = vld [vmem:[%s6 + $0x118] sm:$0xff]
      %v653 = vld [vmem:[%s6 + $0x120] sm:$0xff]
      %v654 = vld [vmem:[%s6 + $0x128] sm:$0xff]
      %v655 = vld [vmem:[%s6 + $0x130] sm:$0xff]
      %v656 = vld [vmem:[%s6 + $0x138] sm:$0xff]
      %v657 = vld [vmem:[%s6 + $0x140] sm:$0xff]
      %v658 = vld [vmem:[%s6 + $0x148] sm:$0xff]
      %v659 = vld [vmem:[%s6 + $0x150] sm:$0xff]
      %v660 = vld [vmem:[%s6 + $0x158] sm:$0xff]
      %v661 = vld [vmem:[%s6 + $0x160] sm:$0xff]
      %v662 = vld [vmem:[%s6 + $0x168] sm:$0xff]
      %v663 = vld [vmem:[%s6 + $0x170] sm:$0xff]
      %v664 = vld [vmem:[%s6 + $0x178] sm:$0xff]
      %v665 = vld [vmem:[%s6 + $0x180] sm:$0xff]
      %v666 = vld [vmem:[%s6 + $0x188] sm:$0xff]
      %v667 = vld [vmem:[%s6 + $0x190] sm:$0xff]
      %v668 = vld [vmem:[%s6 + $0x198] sm:$0xff]
      %v669 = vld [vmem:[%s6 + $0x1a0] sm:$0xff]
      %v670 = vld [vmem:[%s6 + $0x1a8] sm:$0xff]
      %v671 = vld [vmem:[%s6 + $0x1b0] sm:$0xff]
      %v672 = vld [vmem:[%s6 + $0x1b8] sm:$0xff]
      %v673 = vld [vmem:[%s6 + $0x1c0] sm:$0xff]
      %v674 = vld [vmem:[%s6 + $0x1c8] sm:$0xff]
      %v675 = vld [vmem:[%s6 + $0x1d0] sm:$0xff]
      %v676 = vld [vmem:[%s6 + $0x1d8] sm:$0xff]
      %v677 = vld [vmem:[%s6 + $0x1e0] sm:$0xff]
      %v678 = vld [vmem:[%s6 + $0x1e8] sm:$0xff]
      %v679 = vld [vmem:[%s6 + $0x1f0] sm:$0xff]
      %v680 = vld [vmem:[%s6 + $0x1f8] sm:$0xff]
      %v681 = vld [vmem:[%s7] sm:$0xf]
      %v683 = vperm.slane %v681, 0
      %v684 = vperm.slane %v681, 1
      %v685 = vperm.slane %v681, 2
      %v686 = vperm.slane %v681, 3
      %691 = vmatpush.msra.mxu0 %v677
      %692 = vmatpush.msra.mxu0 %v673
      %693 = vmatpush.msra.mxu0 %v669
      %694 = vmatpush.msra.mxu0 %v665
      %695 = vmatpush.msra.mxu0 %v661
      %696 = vmatpush.msra.mxu0 %v657
      %697 = vmatpush.msra.mxu0 %v653
      %698 = vmatpush.msra.mxu0 %v649
      %699 = vmatpush.msra.mxu0 %v645
      %700 = vmatpush.msra.mxu0 %v641
      %701 = vmatpush.msra.mxu0 %v637
      %702 = vmatpush.msra.mxu0 %v633
      %703 = vmatpush.msra.mxu0 %v629
      %704 = vmatpush.msra.mxu0 %v625
      %705 = vmatpush.msra.mxu0 %v621
      %706 = vmatpush.msra.mxu0 %v617
      %707 = vmatmul.f32.gmra.mxu0 %v613
      %v708 = vpop.f32.mrf.mxu0
      %v709 = vadd.f32 %v683, %v708
      %710 = vmatmul.f32.gmra.mxu0 %v614
      %v711 = vpop.f32.mrf.mxu0
      %v712 = vadd.f32 %v683, %v711
      %713 = vmatmul.f32.gmra.mxu0 %v615
      %v714 = vpop.f32.mrf.mxu0
      %v715 = vadd.f32 %v683, %v714
      %716 = vmatmul.f32.gmra.mxu0 %v616
      %v717 = vpop.f32.mrf.mxu0
      %v718 = vadd.f32 %v683, %v717
      %719 = vdwg.mxu0
      %720 = vmatpush.msra.mxu0 %v678
      %721 = vmatpush.msra.mxu0 %v674
      %722 = vmatpush.msra.mxu0 %v670
      %723 = vmatpush.msra.mxu0 %v666
      %724 = vmatpush.msra.mxu0 %v662
      %725 = vmatpush.msra.mxu0 %v658
      %726 = vmatpush.msra.mxu0 %v654
      %727 = vmatpush.msra.mxu0 %v650
      %728 = vmatpush.msra.mxu0 %v646
      %729 = vmatpush.msra.mxu0 %v642
      %730 = vmatpush.msra.mxu0 %v638
      %731 = vmatpush.msra.mxu0 %v634
      %732 = vmatpush.msra.mxu0 %v630
      %733 = vmatpush.msra.mxu0 %v626
      %734 = vmatpush.msra.mxu0 %v622
      %735 = vmatpush.msra.mxu0 %v618
      %736 = vmatmul.f32.gmra.mxu0 %v613
      %v737 = vpop.f32.mrf.mxu0
      %v738 = vadd.f32 %v684, %v737
      %739 = vmatmul.f32.gmra.mxu0 %v614
      %v740 = vpop.f32.mrf.mxu0
      %v741 = vadd.f32 %v684, %v740
      %742 = vmatmul.f32.gmra.mxu0 %v615
      %v743 = vpop.f32.mrf.mxu0
      %v744 = vadd.f32 %v684, %v743
      %745 = vmatmul.f32.gmra.mxu0 %v616
      %v746 = vpop.f32.mrf.mxu0
      %v747 = vadd.f32 %v684, %v746
      %748 = vdwg.mxu0
      %749 = vmatpush.msra.mxu0 %v679
      %750 = vmatpush.msra.mxu0 %v675
      %751 = vmatpush.msra.mxu0 %v671
      %752 = vmatpush.msra.mxu0 %v667
      %753 = vmatpush.msra.mxu0 %v663
      %754 = vmatpush.msra.mxu0 %v659
      %755 = vmatpush.msra.mxu0 %v655
      %756 = vmatpush.msra.mxu0 %v651
      %757 = vmatpush.msra.mxu0 %v647
      %758 = vmatpush.msra.mxu0 %v643
      %759 = vmatpush.msra.mxu0 %v639
      %760 = vmatpush.msra.mxu0 %v635
      %761 = vmatpush.msra.mxu0 %v631
      %762 = vmatpush.msra.mxu0 %v627
      %763 = vmatpush.msra.mxu0 %v623
      %764 = vmatpush.msra.mxu0 %v619
      %765 = vmatmul.f32.gmra.mxu0 %v613
      %v766 = vpop.f32.mrf.mxu0
      %v767 = vadd.f32 %v685, %v766
      %768 = vmatmul.f32.gmra.mxu0 %v614
      %v769 = vpop.f32.mrf.mxu0
      %v770 = vadd.f32 %v685, %v769
      %771 = vmatmul.f32.gmra.mxu0 %v615
      %v772 = vpop.f32.mrf.mxu0
      %v773 = vadd.f32 %v685, %v772
      %774 = vmatmul.f32.gmra.mxu0 %v616
      %v775 = vpop.f32.mrf.mxu0
      %v776 = vadd.f32 %v685, %v775
      %777 = vdwg.mxu0
      %778 = vmatpush.msra.mxu0 %v680
      %779 = vmatpush.msra.mxu0 %v676
      %780 = vmatpush.msra.mxu0 %v672
      %781 = vmatpush.msra.mxu0 %v668
      %782 = vmatpush.msra.mxu0 %v664
      %783 = vmatpush.msra.mxu0 %v660
      %784 = vmatpush.msra.mxu0 %v656
      %785 = vmatpush.msra.mxu0 %v652
      %786 = vmatpush.msra.mxu0 %v648
      %787 = vmatpush.msra.mxu0 %v644
      %788 = vmatpush.msra.mxu0 %v640
      %789 = vmatpush.msra.mxu0 %v636
      %790 = vmatpush.msra.mxu0 %v632
      %791 = vmatpush.msra.mxu0 %v628
      %792 = vmatpush.msra.mxu0 %v624
      %793 = vmatpush.msra.mxu0 %v620
      %794 = vmatmul.f32.gmra.mxu0 %v613
      %v795 = vpop.f32.mrf.mxu0
      %v796 = vadd.f32 %v686, %v795
      %797 = vmatmul.f32.gmra.mxu0 %v614
      %v798 = vpop.f32.mrf.mxu0
      %v799 = vadd.f32 %v686, %v798
      %800 = vmatmul.f32.gmra.mxu0 %v615
      %v801 = vpop.f32.mrf.mxu0
      %v802 = vadd.f32 %v686, %v801
      %803 = vmatmul.f32.gmra.mxu0 %v616
      %v804 = vpop.f32.mrf.mxu0
      %v805 = vadd.f32 %v686, %v804
      %806 = vdwg.mxu0
      %v807 = vmax.f32 %v709, 0.0
      %v808 = vmax.f32 %v738, 0.0
      %v809 = vmax.f32 %v767, 0.0
      %v810 = vmax.f32 %v796, 0.0
      %v811 = vmax.f32 %v712, 0.0
      %v812 = vmax.f32 %v741, 0.0
      %v813 = vmax.f32 %v770, 0.0
      %v814 = vmax.f32 %v799, 0.0
      %v815 = vmax.f32 %v715, 0.0
      %v816 = vmax.f32 %v744, 0.0
      %v817 = vmax.f32 %v773, 0.0
      %v818 = vmax.f32 %v802, 0.0
      %v819 = vmax.f32 %v718, 0.0
      %v820 = vmax.f32 %v747, 0.0
      %v821 = vmax.f32 %v776, 0.0
      %v822 = vmax.f32 %v805, 0.0
      %v823 = vld [vmem:[%s8] sm:$0xff]
      %v824 = vld [vmem:[%s8 + $0x8] sm:$0xff]
      %v825 = vld [vmem:[%s8 + $0x10] sm:$0xff]
      %v826 = vld [vmem:[%s8 + $0x18] sm:$0xff]
      %v827 = vld [vmem:[%s8 + $0x20] sm:$0xff]
      %v828 = vld [vmem:[%s8 + $0x28] sm:$0xff]
      %v829 = vld [vmem:[%s8 + $0x30] sm:$0xff]
      %v830 = vld [vmem:[%s8 + $0x38] sm:$0xff]
      %v831 = vld [vmem:[%s8 + $0x40] sm:$0xff]
      %v832 = vld [vmem:[%s8 + $0x48] sm:$0xff]
      %v833 = vld [vmem:[%s8 + $0x50] sm:$0xff]
      %v834 = vld [vmem:[%s8 + $0x58] sm:$0xff]
      %v835 = vld [vmem:[%s8 + $0x60] sm:$0xff]
      %v836 = vld [vmem:[%s8 + $0x68] sm:$0xff]
      %v837 = vld [vmem:[%s8 + $0x70] sm:$0xff]
      %v838 = vld [vmem:[%s8 + $0x78] sm:$0xff]
      %v839 = vld [vmem:[%s8 + $0x80] sm:$0xff]
      %v840 = vld [vmem:[%s8 + $0x88] sm:$0xff]
      %v841 = vld [vmem:[%s8 + $0x90] sm:$0xff]
      %v842 = vld [vmem:[%s8 + $0x98] sm:$0xff]
      %v843 = vld [vmem:[%s8 + $0xa0] sm:$0xff]
      %v844 = vld [vmem:[%s8 + $0xa8] sm:$0xff]
      %v845 = vld [vmem:[%s8 + $0xb0] sm:$0xff]
      %v846 = vld [vmem:[%s8 + $0xb8] sm:$0xff]
      %v847 = vld [vmem:[%s8 + $0xc0] sm:$0xff]
      %v848 = vld [vmem:[%s8 + $0xc8] sm:$0xff]
      %v849 = vld [vmem:[%s8 + $0xd0] sm:$0xff]
      %v850 = vld [vmem:[%s8 + $0xd8] sm:$0xff]
      %v851 = vld [vmem:[%s8 + $0xe0] sm:$0xff]
      %v852 = vld [vmem:[%s8 + $0xe8] sm:$0xff]
      %v853 = vld [vmem:[%s8 + $0xf0] sm:$0xff]
      %v854 = vld [vmem:[%s8 + $0xf8] sm:$0xff]
      %v855 = vld [vmem:[%s8 + $0x100] sm:$0xff]
      %v856 = vld [vmem:[%s8 + $0x108] sm:$0xff]
      %v857 = vld [vmem:[%s8 + $0x110] sm:$0xff]
      %v858 = vld [vmem:[%s8 + $0x118] sm:$0xff]
      %v859 = vld [vmem:[%s8 + $0x120] sm:$0xff]
      %v860 = vld [vmem:[%s8 + $0x128] sm:$0xff]
      %v861 = vld [vmem:[%s8 + $0x130] sm:$0xff]
      %v862 = vld [vmem:[%s8 + $0x138] sm:$0xff]
      %v863 = vld [vmem:[%s8 + $0x140] sm:$0xff]
      %v864 = vld [vmem:[%s8 + $0x148] sm:$0xff]
      %v865 = vld [vmem:[%s8 + $0x150] sm:$0xff]
      %v866 = vld [vmem:[%s8 + $0x158] sm:$0xff]
      %v867 = vld [vmem:[%s8 + $0x160] sm:$0xff]
      %v868 = vld [vmem:[%s8 + $0x168] sm:$0xff]
      %v869 = vld [vmem:[%s8 + $0x170] sm:$0xff]
      %v870 = vld [vmem:[%s8 + $0x178] sm:$0xff]
      %v871 = vld [vmem:[%s8 + $0x180] sm:$0xff]
      %v872 = vld [vmem:[%s8 + $0x188] sm:$0xff]
      %v873 = vld [vmem:[%s8 + $0x190] sm:$0xff]
      %v874 = vld [vmem:[%s8 + $0x198] sm:$0xff]
      %v875 = vld [vmem:[%s8 + $0x1a0] sm:$0xff]
      %v876 = vld [vmem:[%s8 + $0x1a8] sm:$0xff]
      %v877 = vld [vmem:[%s8 + $0x1b0] sm:$0xff]
      %v878 = vld [vmem:[%s8 + $0x1b8] sm:$0xff]
      %v879 = vld [vmem:[%s8 + $0x1c0] sm:$0xff]
      %v880 = vld [vmem:[%s8 + $0x1c8] sm:$0xff]
      %v881 = vld [vmem:[%s8 + $0x1d0] sm:$0xff]
      %v882 = vld [vmem:[%s8 + $0x1d8] sm:$0xff]
      %v883 = vld [vmem:[%s8 + $0x1e0] sm:$0xff]
      %v884 = vld [vmem:[%s8 + $0x1e8] sm:$0xff]
      %v885 = vld [vmem:[%s8 + $0x1f0] sm:$0xff]
      %v886 = vld [vmem:[%s8 + $0x1f8] sm:$0xff]
      %v887 = vld [vmem:[%s9] sm:$0x1]
      %v889 = vperm.slane %v887, 0
      %891 = vmatpush.msra.mxu0 %v838
      %892 = vmatpush.msra.mxu0 %v837
      %893 = vmatpush.msra.mxu0 %v836
      %894 = vmatpush.msra.mxu0 %v835
      %895 = vmatpush.msra.mxu0 %v834
      %896 = vmatpush.msra.mxu0 %v833
      %897 = vmatpush.msra.mxu0 %v832
      %898 = vmatpush.msra.mxu0 %v831
      %899 = vmatpush.msra.mxu0 %v830
      %900 = vmatpush.msra.mxu0 %v829
      %901 = vmatpush.msra.mxu0 %v828
      %902 = vmatpush.msra.mxu0 %v827
      %903 = vmatpush.msra.mxu0 %v826
      %904 = vmatpush.msra.mxu0 %v825
      %905 = vmatpush.msra.mxu0 %v824
      %906 = vmatpush.msra.mxu0 %v823
      %907 = vmatmul.f32.gmra.mxu0 %v807
      %v908 = vpop.f32.mrf.mxu0
      %v909 = vadd.f32 %v889, %v908
      %910 = vmatmul.f32.gmra.mxu0 %v811
      %v911 = vpop.f32.mrf.mxu0
      %v912 = vadd.f32 %v889, %v911
      %913 = vmatmul.f32.gmra.mxu0 %v815
      %v914 = vpop.f32.mrf.mxu0
      %v915 = vadd.f32 %v889, %v914
      %916 = vmatmul.f32.gmra.mxu0 %v819
      %v917 = vpop.f32.mrf.mxu0
      %v918 = vadd.f32 %v889, %v917
      %919 = vdwg.mxu0
      %920 = vmatpush.msra.mxu0 %v854
      %921 = vmatpush.msra.mxu0 %v853
      %922 = vmatpush.msra.mxu0 %v852
      %923 = vmatpush.msra.mxu0 %v851
      %924 = vmatpush.msra.mxu0 %v850
      %925 = vmatpush.msra.mxu0 %v849
      %926 = vmatpush.msra.mxu0 %v848
      %927 = vmatpush.msra.mxu0 %v847
      %928 = vmatpush.msra.mxu0 %v846
      %929 = vmatpush.msra.mxu0 %v845
      %930 = vmatpush.msra.mxu0 %v844
      %931 = vmatpush.msra.mxu0 %v843
      %932 = vmatpush.msra.mxu0 %v842
      %933 = vmatpush.msra.mxu0 %v841
      %934 = vmatpush.msra.mxu0 %v840
      %935 = vmatpush.msra.mxu0 %v839
      %936 = vmatmul.f32.gmra.mxu0 %v808
      %v937 = vpop.f32.mrf.mxu0
      %v938 = vadd.f32 %v909, %v937
      %939 = vmatmul.f32.gmra.mxu0 %v812
      %v940 = vpop.f32.mrf.mxu0
      %v941 = vadd.f32 %v912, %v940
      %942 = vmatmul.f32.gmra.mxu0 %v816
      %v943 = vpop.f32.mrf.mxu0
      %v944 = vadd.f32 %v915, %v943
      %945 = vmatmul.f32.gmra.mxu0 %v820
      %v946 = vpop.f32.mrf.mxu0
      %v947 = vadd.f32 %v918, %v946
      %948 = vdwg.mxu0
      %949 = vmatpush.msra.mxu0 %v870
      %950 = vmatpush.msra.mxu0 %v869
      %951 = vmatpush.msra.mxu0 %v868
      %952 = vmatpush.msra.mxu0 %v867
      %953 = vmatpush.msra.mxu0 %v866
      %954 = vmatpush.msra.mxu0 %v865
      %955 = vmatpush.msra.mxu0 %v864
      %956 = vmatpush.msra.mxu0 %v863
      %957 = vmatpush.msra.mxu0 %v862
      %958 = vmatpush.msra.mxu0 %v861
      %959 = vmatpush.msra.mxu0 %v860
      %960 = vmatpush.msra.mxu0 %v859
      %961 = vmatpush.msra.mxu0 %v858
      %962 = vmatpush.msra.mxu0 %v857
      %963 = vmatpush.msra.mxu0 %v856
      %964 = vmatpush.msra.mxu0 %v855
      %965 = vmatmul.f32.gmra.mxu0 %v809
      %v966 = vpop.f32.mrf.mxu0
      %v967 = vadd.f32 %v938, %v966
      %968 = vmatmul.f32.gmra.mxu0 %v813
      %v969 = vpop.f32.mrf.mxu0
      %v970 = vadd.f32 %v941, %v969
      %971 = vmatmul.f32.gmra.mxu0 %v817
      %v972 = vpop.f32.mrf.mxu0
      %v973 = vadd.f32 %v944, %v972
      %974 = vmatmul.f32.gmra.mxu0 %v821
      %v975 = vpop.f32.mrf.mxu0
      %v976 = vadd.f32 %v947, %v975
      %977 = vdwg.mxu0
      %978 = vmatpush.msra.mxu0 %v886
      %979 = vmatpush.msra.mxu0 %v885
      %980 = vmatpush.msra.mxu0 %v884
      %981 = vmatpush.msra.mxu0 %v883
      %982 = vmatpush.msra.mxu0 %v882
      %983 = vmatpush.msra.mxu0 %v881
      %984 = vmatpush.msra.mxu0 %v880
      %985 = vmatpush.msra.mxu0 %v879
      %986 = vmatpush.msra.mxu0 %v878
      %987 = vmatpush.msra.mxu0 %v877
      %988 = vmatpush.msra.mxu0 %v876
      %989 = vmatpush.msra.mxu0 %v875
      %990 = vmatpush.msra.mxu0 %v874
      %991 = vmatpush.msra.mxu0 %v873
      %992 = vmatpush.msra.mxu0 %v872
      %993 = vmatpush.msra.mxu0 %v871
      %994 = vmatmul.f32.gmra.mxu0 %v810
      %v995 = vpop.f32.mrf.mxu0
      %v996 = vadd.f32 %v967, %v995
      %997 = vmatmul.f32.gmra.mxu0 %v814
      %v998 = vpop.f32.mrf.mxu0
      %v999 = vadd.f32 %v970, %v998
      %1000 = vmatmul.f32.gmra.mxu0 %v818
      %v1001 = vpop.f32.mrf.mxu0
      %v1002 = vadd.f32 %v973, %v1001
      %1003 = vmatmul.f32.gmra.mxu0 %v822
      %v1004 = vpop.f32.mrf.mxu0
      %v1005 = vadd.f32 %v976, %v1004
      %1006 = vdwg.mxu0
      %vm1007 = vcmask 23552
      %1008 = vst.msk [vmem:[%s361] sm:$0xff] %vm1007, %v996
      %1009 = vst.msk [vmem:[%s361 + $0x8] sm:$0xff] %vm1007, %v999
      %1010 = vst.msk [vmem:[%s361 + $0x10] sm:$0xff] %vm1007, %v1002
      %1011 = vst.msk [vmem:[%s361 + $0x18] sm:$0xff] %vm1007, %v1005
      %s1012 = smul.u32 4, %s21
      %p1013 = scmp.lt.s32.totalorder %s1012, 7
      %s1014 = scalar_select %p1013, %s1012, 7
      %s1015 = smul.addr %s1014, 8
      %s1016 = scalar_lea.vmem %s10, %s1015
      // Predicated region
      $region61: #{conditional_ddpm_forward.1} parent=59 // pred_check
        %p1017 = pneg %p254
      $region62: #{conditional_ddpm_forward.1} parent=59 // pred_check_branch
        %1019 = sbr.rel (%p1017) target = $region64
      $region63: #{conditional_ddpm_forward.1} parent=59 // pred_region
        %s1020 = smul.u32 4, %s21
      $region64: #{conditional_ddpm_forward.1} parent=59 // pred_fallthru
        _
    $region60: #{conditional_ddpm_forward.1} parent=5 // pred_fallthru
      _
    %p1021 = scmp.le.s32.totalorder 2, %s16
    // Predicated region
    $region65: #{conditional_ddpm_forward.1} parent=5 // pred_check
      %p1022 = pneg %p1021
    $region66: #{conditional_ddpm_forward.1} parent=5 // pred_check_branch
      %1024 = sbr.rel (%p1022) target = $region68
    $region67: #{conditional_ddpm_forward.1} parent=5 // pred_region
      %s1025 = ssub.s32 %s16, 2
      // Predicated region
      $region69: #{conditional_ddpm_forward.1} parent=67 // pred_check
        %p1026 = pneg %p260
      $region70: #{conditional_ddpm_forward.1} parent=67 // pred_check_branch
        %1028 = sbr.rel (%p1026) target = $region72
      $region71: #{conditional_ddpm_forward.1} parent=67 // pred_region
        %s1029 = smul.u32 4, %s22
        %p1030 = scmp.lt.s32.totalorder %s1029, 7
        %s1031 = scalar_select %p1030, %s1029, 7
        %s1032 = smul.addr %s1031, 8
        %s1033 = scalar_lea.vmem %s10, %s1032
      $region72: #{conditional_ddpm_forward.1} parent=67 // pred_fallthru
        _
    $region68: #{conditional_ddpm_forward.1} parent=5 // pred_fallthru
      _
  $region6: #{conditional_ddpm_forward.1} parent=0 // loop_footer
    %s20 = sadd.s32 1, %s16
  $region7: #{conditional_ddpm_forward.1} parent=0 // loop_footer_branch
    %15 = sbr.rel target = $region3
  $region8: #{conditional_ddpm_forward.1} parent=0 // loop_exit
    _

</llo_original>
